<compile_context>
chip_gen: v6e
topology: v6e:2x2x1
jax: 0.10.0
libtpu: 0.0.40
codegen_flags: <defaults>
</compile_context>

<pallas_src>
import jax
import jax.numpy as jnp
from jax.experimental import pallas as pl
from jax.experimental.pallas import tpu as pltpu


# ----------------------------------------------------------------------------
# Shared body: 3-layer MLP -> L2 normalize, bf16 MXU operands / f32 accumulate
# ----------------------------------------------------------------------------
def _mlp_bottleneck(x, w1, b1, w2, b2, w3, b3, approx):
    # x: (block_b, in_dim) bf16; weights bf16; biases f32 rows.
    h = jnp.dot(x, w1, preferred_element_type=jnp.float32) + b1
    h = jax.nn.gelu(h, approximate=approx)
    h = jnp.dot(h.astype(jnp.bfloat16), w2, preferred_element_type=jnp.float32) + b2
    h = jax.nn.gelu(h, approximate=approx)
    h = jnp.dot(h.astype(jnp.bfloat16), w3, preferred_element_type=jnp.float32) + b3
    # F.normalize(x, dim=-1, p=2): x / max(||x||, 1e-12), via EUP rsqrt.
    sq = jnp.sum(h * h, axis=-1, keepdims=True)
    h = h * jax.lax.rsqrt(jnp.maximum(sq, 1e-24))
    return h.astype(jnp.bfloat16)


def _make_fused_kernel(approx):
    # Grid = (batch tiles,). Whole out_dim produced per batch tile.
    def kernel(x_ref, w1_ref, b1_ref, w2_ref, b2_ref, w3_ref, b3_ref,
               wl_ref, o_ref):
        h = _mlp_bottleneck(x_ref[...], w1_ref[...], b1_ref[...], w2_ref[...],
                            b2_ref[...], w3_ref[...], b3_ref[...], approx)
        o_ref[...] = jnp.dot(h, wl_ref[...],
                             preferred_element_type=jnp.float32).astype(o_ref.dtype)
    return kernel


def _make_tiled_kernel(approx):
    # Grid = (batch tiles, out_dim tiles). MLP + normalize computed once per
    # batch tile (j == 0) and cached in VMEM scratch; every j-step then only
    # runs the (bottleneck x block_n) weight-norm matmul.
    def kernel(x_ref, w1_ref, b1_ref, w2_ref, b2_ref, w3_ref, b3_ref,
               wl_ref, o_ref, h_ref):
        @pl.when(pl.program_id(1) == 0)
        def _():
            h_ref[...] = _mlp_bottleneck(
                x_ref[...], w1_ref[...], b1_ref[...], w2_ref[...],
                b2_ref[...], w3_ref[...], b3_ref[...], approx)

        o_ref[...] = jnp.dot(h_ref[...], wl_ref[...],
                             preferred_element_type=jnp.float32).astype(o_ref.dtype)
    return kernel


# ----------------------------------------------------------------------------
# Wrapper
# ----------------------------------------------------------------------------
def dino_head_forward(x, params, *, block_b=512, block_n=2048,
                      approx_gelu=True, out_dtype=jnp.float32):
    """x: (B, in_dim). Returns (B, out_dim) in `out_dtype`."""
    w1, b1, w2, b2, w3, b3, wl = params
    B, in_dim = x.shape
    hidden_dim = w1.shape[1]
    bottleneck_dim = w3.shape[1]
    out_dim = wl.shape[1]
    # in/hidden/bottleneck dims are assumed lane friendly (multiples of 128),
    # which holds for the real configs (768/1024/1536, 2048, 256).

    # bf16 activations into the kernel (halves x DMA; the cast fuses outside).
    x = x.astype(jnp.bfloat16)

    # --- batch tiling (multiples of 16 for bf16 sublane packing) -------------
    b16 = pl.cdiv(B, 16) * 16
    block_b = min(block_b, b16)
    # v7x megacore: if the whole batch would be one tile, split it in two so
    # both TensorCores get work on the "parallel" axis.
    if b16 // block_b < 2 and b16 >= 32:
        block_b = pl.cdiv(pl.cdiv(b16, 2), 16) * 16
    B_p = pl.cdiv(B, block_b) * block_b
    if B_p != B:
        x = jnp.pad(x, ((0, B_p - B), (0, 0)))

    # --- out_dim tiling: lane-dense (multiple of 128) output stores ----------
    out_p = pl.cdiv(out_dim, 128) * 128
    block_n = min(block_n, out_p)
    out_p = pl.cdiv(out_p, block_n) * block_n
    if out_p != out_dim:
        wl = jnp.pad(wl, ((0, 0), (0, out_p - out_dim)))

    grid_i = B_p // block_b
    grid_j = out_p // block_n

    single = pl.Buffered(1)  # grid-invariant inputs: no double-buffering

    if grid_j == 1:
        # Fused path: no j axis, no scratch / pl.when machinery.
        kernel = _make_fused_kernel(approx_gelu)
        grid = (grid_i,)
        in_specs = [
            pl.BlockSpec((block_b, in_dim), lambda i: (i, 0)),                   # x
            pl.BlockSpec((in_dim, hidden_dim), lambda i: (0, 0),
                         pipeline_mode=single),                                  # w1
            pl.BlockSpec((1, hidden_dim), lambda i: (0, 0),
                         pipeline_mode=single),                                  # b1
            pl.BlockSpec((hidden_dim, hidden_dim), lambda i: (0, 0),
                         pipeline_mode=single),                                  # w2
            pl.BlockSpec((1, hidden_dim), lambda i: (0, 0),
                         pipeline_mode=single),                                  # b2
            pl.BlockSpec((hidden_dim, bottleneck_dim), lambda i: (0, 0),
                         pipeline_mode=single),                                  # w3
            pl.BlockSpec((1, bottleneck_dim), lambda i: (0, 0),
                         pipeline_mode=single),                                  # b3
            pl.BlockSpec((bottleneck_dim, out_p), lambda i: (0, 0),
                         pipeline_mode=single),                                  # wl
        ]
        out_specs = pl.BlockSpec((block_b, out_p), lambda i: (i, 0))
        scratch_shapes = []
        dims = ("parallel",)
    else:
        # N-tiled path. j MUST stay the innermost, "arbitrary" axis (h_ref
        # caching invariant).
        kernel = _make_tiled_kernel(approx_gelu)
        grid = (grid_i, grid_j)
        in_specs = [
            pl.BlockSpec((block_b, in_dim), lambda i, j: (i, 0)),                # x
            pl.BlockSpec((in_dim, hidden_dim), lambda i, j: (0, 0),
                         pipeline_mode=single),                                  # w1
            pl.BlockSpec((1, hidden_dim), lambda i, j: (0, 0),
                         pipeline_mode=single),                                  # b1
            pl.BlockSpec((hidden_dim, hidden_dim), lambda i, j: (0, 0),
                         pipeline_mode=single),                                  # w2
            pl.BlockSpec((1, hidden_dim), lambda i, j: (0, 0),
                         pipeline_mode=single),                                  # b2
            pl.BlockSpec((hidden_dim, bottleneck_dim), lambda i, j: (0, 0),
                         pipeline_mode=single),                                  # w3
            pl.BlockSpec((1, bottleneck_dim), lambda i, j: (0, 0),
                         pipeline_mode=single),                                  # b3
            pl.BlockSpec((bottleneck_dim, block_n), lambda i, j: (0, j)),        # wl
        ]
        out_specs = pl.BlockSpec((block_b, block_n), lambda i, j: (i, j))
        scratch_shapes = [pltpu.VMEM((block_b, bottleneck_dim), jnp.bfloat16)]
        dims = ("parallel", "arbitrary")

    out = pl.pallas_call(
        kernel,
        out_shape=jax.ShapeDtypeStruct((B_p, out_p), out_dtype),
        grid_spec=pltpu.PrefetchScalarGridSpec(
            num_scalar_prefetch=0,
            grid=grid,
            in_specs=in_specs,
            out_specs=out_specs,
            scratch_shapes=scratch_shapes,
        ),
        compiler_params=pltpu.CompilerParams(
            dimension_semantics=dims,
            vmem_limit_bytes=40 * 1024 * 1024),
    )(x, w1, b1, w2, b2, w3, b3, wl)

    return out[:B, :out_dim]


# ----------------------------------------------------------------------------
# Parameter init (deterministic, mirrors DINOHead.__init__ shapes / init rules)
# ----------------------------------------------------------------------------
def init_dino_head_params(key, in_dim, out_dim, hidden_dim, bottleneck_dim):
    k1, k2, k3, k4 = jax.random.split(key, 4)
    std = 0.02  # trunc_normal_(std=0.02); biases = 0

    def linear_w(k, fan_in, fan_out):
        # Stored transposed vs PyTorch, i.e. (in, out), and in bf16 for the MXU.
        w = std * jax.random.truncated_normal(k, -2.0, 2.0, (fan_in, fan_out),
                                              jnp.float32)
        return w.astype(jnp.bfloat16)

    w1 = linear_w(k1, in_dim, hidden_dim)
    b1 = jnp.zeros((1, hidden_dim), jnp.float32)
    w2 = linear_w(k2, hidden_dim, hidden_dim)
    b2 = jnp.zeros((1, hidden_dim), jnp.float32)
    w3 = linear_w(k3, hidden_dim, bottleneck_dim)
    b3 = jnp.zeros((1, bottleneck_dim), jnp.float32)

    # last_layer = weight_norm(Linear(bottleneck, out, bias=False)); weight_g=1
    # -> effective weight = weight_v / ||weight_v||_2 (norm over the input dim,
    # per output unit). Stored transposed as (bottleneck, out).
    v = jax.random.normal(k4, (out_dim, bottleneck_dim), jnp.float32)
    v = v / jnp.sqrt(jnp.sum(v * v, axis=1, keepdims=True))
    wl = v.T.astype(jnp.bfloat16)

    return (w1, b1, w2, b2, w3, b3, wl)


# ----------------------------------------------------------------------------
# TextEncoder forward (glue): CLS-token select (-> bf16) + Pallas DINOHead
# ----------------------------------------------------------------------------
def text_encoder_forward(last_hidden_state, params, **kw):
    # TextEncoder.forward: projector(DINOHead) on last_hidden_state[:, 0, :].
    cls = last_hidden_state[:, 0, :].astype(jnp.bfloat16)  # fuses slice + cast
    return dino_head_forward(cls, params, **kw)


# Pure-JAX reference (f32) for a sanity check.
def reference_forward(last_hidden_state, params, approx=True):
    w1, b1, w2, b2, w3, b3, wl = params
    f32 = jnp.float32
    x = last_hidden_state[:, 0, :].astype(f32)
    h = jax.nn.gelu(x @ w1.astype(f32) + b1, approximate=approx)
    h = jax.nn.gelu(h @ w2.astype(f32) + b2, approximate=approx)
    h = h @ w3.astype(f32) + b3
    h = h / jnp.maximum(jnp.sqrt(jnp.sum(h * h, -1, keepdims=True)), 1e-12)
    return h @ wl.astype(f32)


if __name__ == "__main__":
    # Scaled-down but lane-aligned shapes (production: in=768/1024/1536,
    # hidden=2048, bottleneck=256, out=emb_dim).
    B, S = 32, 4
    llm_emb_dim, out_dim, hidden_dim, bottleneck_dim = 256, 256, 256, 128

    key = jax.random.PRNGKey(0)
    k_x, k_p = jax.random.split(key)
    last_hidden_state = jax.random.normal(k_x, (B, S, llm_emb_dim), jnp.float32)
    params = init_dino_head_params(k_p, llm_emb_dim, out_dim,
                                   hidden_dim, bottleneck_dim)

    # Path 1: fused kernel (out_dim fits a single lane-dense tile, no j axis).
    out_fused = text_encoder_forward(last_hidden_state, params)
    out_fused = jax.block_until_ready(out_fused)

    # Path 2: N-tiled kernel (force grid_j > 1 to exercise the pl.when/scratch
    # caching path).
    cls = last_hidden_state[:, 0, :].astype(jnp.bfloat16)
    out_tiled = dino_head_forward(cls, params, block_n=128)
    out_tiled = jax.block_until_ready(out_tiled)

    ref = reference_forward(last_hidden_state, params, approx=True)
    assert out_fused.shape == (B, out_dim)
    assert bool(jnp.all(jnp.isfinite(out_fused)))
    # bf16 matmul operands in the kernel vs f32 reference -> loose tolerance.
    assert jnp.allclose(out_fused, ref, atol=2e-2, rtol=2e-2)
    assert jnp.allclose(out_tiled, ref, atol=2e-2, rtol=2e-2)
    # Both kernel paths compute the same thing.
    assert jnp.allclose(out_fused, out_tiled, atol=1e-3, rtol=1e-3)

    print("KERNEL_OK")
</pallas_src>

<mosaic_0001>
module attributes {stable_mosaic.version = 11 : i64} {
  func.func @kernel(%arg0: i32, %arg1: memref<16x256xbf16, #tpu.memory_space<vmem>>, %arg2: memref<256x256xbf16, #tpu.memory_space<vmem>>, %arg3: memref<1x256xf32, #tpu.memory_space<vmem>>, %arg4: memref<256x256xbf16, #tpu.memory_space<vmem>>, %arg5: memref<1x256xf32, #tpu.memory_space<vmem>>, %arg6: memref<256x128xbf16, #tpu.memory_space<vmem>>, %arg7: memref<1x128xf32, #tpu.memory_space<vmem>>, %arg8: memref<128x256xbf16, #tpu.memory_space<vmem>>, %arg9: memref<16x256xf32, #tpu.memory_space<vmem>>) attributes {dimension_semantics = [#tpu.dimension_semantics<parallel>], iteration_bounds = array<i64: 2>, scalar_prefetch = 0 : i64, scratch_operands = 0 : i64, tpu.core_type = #tpu.core_type<tc>, window_params = [{transform_indices = @transform_0, window_bounds = array<i64: 16, 256>}, {pipeline_mode = #tpu.pipeline_mode<synchronous>, transform_indices = @transform_1, window_bounds = array<i64: 256, 256>}, {pipeline_mode = #tpu.pipeline_mode<synchronous>, transform_indices = @transform_2, window_bounds = array<i64: 1, 256>}, {pipeline_mode = #tpu.pipeline_mode<synchronous>, transform_indices = @transform_3, window_bounds = array<i64: 256, 256>}, {pipeline_mode = #tpu.pipeline_mode<synchronous>, transform_indices = @transform_4, window_bounds = array<i64: 1, 256>}, {pipeline_mode = #tpu.pipeline_mode<synchronous>, transform_indices = @transform_5, window_bounds = array<i64: 256, 128>}, {pipeline_mode = #tpu.pipeline_mode<synchronous>, transform_indices = @transform_6, window_bounds = array<i64: 1, 128>}, {pipeline_mode = #tpu.pipeline_mode<synchronous>, transform_indices = @transform_7, window_bounds = array<i64: 128, 256>}, {transform_indices = @transform_8, window_bounds = array<i64: 16, 256>}]} {
    %c0 = arith.constant 0 : index
    %c0_0 = arith.constant 0 : index
    %0 = vector.load %arg1[%c0, %c0_0] : memref<16x256xbf16, #tpu.memory_space<vmem>>, vector<16x256xbf16>
    %c0_1 = arith.constant 0 : index
    %c0_2 = arith.constant 0 : index
    %1 = vector.load %arg2[%c0_1, %c0_2] : memref<256x256xbf16, #tpu.memory_space<vmem>>, vector<256x256xbf16>
    %c0_3 = arith.constant 0 : index
    %c0_4 = arith.constant 0 : index
    %2 = vector.load %arg3[%c0_3, %c0_4] : memref<1x256xf32, #tpu.memory_space<vmem>>, vector<1x256xf32>
    %c0_5 = arith.constant 0 : index
    %c0_6 = arith.constant 0 : index
    %3 = vector.load %arg4[%c0_5, %c0_6] : memref<256x256xbf16, #tpu.memory_space<vmem>>, vector<256x256xbf16>
    %c0_7 = arith.constant 0 : index
    %c0_8 = arith.constant 0 : index
    %4 = vector.load %arg5[%c0_7, %c0_8] : memref<1x256xf32, #tpu.memory_space<vmem>>, vector<1x256xf32>
    %c0_9 = arith.constant 0 : index
    %c0_10 = arith.constant 0 : index
    %5 = vector.load %arg6[%c0_9, %c0_10] : memref<256x128xbf16, #tpu.memory_space<vmem>>, vector<256x128xbf16>
    %c0_11 = arith.constant 0 : index
    %c0_12 = arith.constant 0 : index
    %6 = vector.load %arg7[%c0_11, %c0_12] : memref<1x128xf32, #tpu.memory_space<vmem>>, vector<1x128xf32>
    %cst = arith.constant dense<0.000000e+00> : vector<16x256xf32>
    %7 = tpu.matmul %0, %1, %cst {dimension_numbers = #tpu.dot_dimension_numbers<[1], [0], [0], [1], [0, 0, 1, 1], [], []>} : vector<16x256xbf16>, vector<256x256xbf16>, vector<16x256xf32> -> vector<16x256xf32>
    %8 = vector.broadcast %2 : vector<1x256xf32> to vector<16x256xf32>
    %9 = arith.addf %7, %8 : vector<16x256xf32>
    %10 = arith.mulf %9, %9 : vector<16x256xf32>
    %11 = arith.mulf %9, %10 : vector<16x256xf32>
    %cst_13 = arith.constant 4.471500e-02 : f32
    %12 = vector.broadcast %cst_13 : f32 to vector<16x256xf32>
    %13 = arith.mulf %12, %11 : vector<16x256xf32>
    %14 = arith.addf %9, %13 : vector<16x256xf32>
    %cst_14 = arith.constant 0.797884583 : f32
    %15 = vector.broadcast %cst_14 : f32 to vector<16x256xf32>
    %16 = arith.mulf %15, %14 : vector<16x256xf32>
    %17 = math.tanh %16 : vector<16x256xf32>
    %cst_15 = arith.constant 1.000000e+00 : f32
    %18 = vector.broadcast %cst_15 : f32 to vector<16x256xf32>
    %19 = arith.addf %18, %17 : vector<16x256xf32>
    %cst_16 = arith.constant 5.000000e-01 : f32
    %20 = vector.broadcast %cst_16 : f32 to vector<16x256xf32>
    %21 = arith.mulf %20, %19 : vector<16x256xf32>
    %22 = arith.mulf %9, %21 : vector<16x256xf32>
    %23 = arith.truncf %22 : vector<16x256xf32> to vector<16x256xbf16>
    %cst_17 = arith.constant dense<0.000000e+00> : vector<16x256xf32>
    %24 = tpu.matmul %23, %3, %cst_17 {dimension_numbers = #tpu.dot_dimension_numbers<[1], [0], [0], [1], [0, 0, 1, 1], [], []>} : vector<16x256xbf16>, vector<256x256xbf16>, vector<16x256xf32> -> vector<16x256xf32>
    %25 = vector.broadcast %4 : vector<1x256xf32> to vector<16x256xf32>
    %26 = arith.addf %24, %25 : vector<16x256xf32>
    %27 = arith.mulf %26, %26 : vector<16x256xf32>
    %28 = arith.mulf %26, %27 : vector<16x256xf32>
    %cst_18 = arith.constant 4.471500e-02 : f32
    %29 = vector.broadcast %cst_18 : f32 to vector<16x256xf32>
    %30 = arith.mulf %29, %28 : vector<16x256xf32>
    %31 = arith.addf %26, %30 : vector<16x256xf32>
    %cst_19 = arith.constant 0.797884583 : f32
    %32 = vector.broadcast %cst_19 : f32 to vector<16x256xf32>
    %33 = arith.mulf %32, %31 : vector<16x256xf32>
    %34 = math.tanh %33 : vector<16x256xf32>
    %cst_20 = arith.constant 1.000000e+00 : f32
    %35 = vector.broadcast %cst_20 : f32 to vector<16x256xf32>
    %36 = arith.addf %35, %34 : vector<16x256xf32>
    %cst_21 = arith.constant 5.000000e-01 : f32
    %37 = vector.broadcast %cst_21 : f32 to vector<16x256xf32>
    %38 = arith.mulf %37, %36 : vector<16x256xf32>
    %39 = arith.mulf %26, %38 : vector<16x256xf32>
    %40 = arith.truncf %39 : vector<16x256xf32> to vector<16x256xbf16>
    %cst_22 = arith.constant dense<0.000000e+00> : vector<16x128xf32>
    %41 = tpu.matmul %40, %5, %cst_22 {dimension_numbers = #tpu.dot_dimension_numbers<[1], [0], [0], [1], [0, 0, 1, 1], [], []>} : vector<16x256xbf16>, vector<256x128xbf16>, vector<16x128xf32> -> vector<16x128xf32>
    %42 = vector.broadcast %6 : vector<1x128xf32> to vector<16x128xf32>
    %43 = arith.addf %41, %42 : vector<16x128xf32>
    %44 = arith.mulf %43, %43 : vector<16x128xf32>
    %cst_23 = arith.constant dense<0.000000e+00> : vector<16xf32>
    %45 = vector.multi_reduction <add>, %44, %cst_23 [1] : vector<16x128xf32> to vector<16xf32>
    %46 = vector.shape_cast %45 : vector<16xf32> to vector<16x1xf32>
    %cst_24 = arith.constant 1.000000e-24 : f32
    %47 = vector.broadcast %cst_24 : f32 to vector<16x1xf32>
    %48 = arith.maximumf %46, %47 : vector<16x1xf32>
    %49 = math.rsqrt %48 : vector<16x1xf32>
    %50 = vector.broadcast %49 : vector<16x1xf32> to vector<16x128xf32>
    %51 = arith.mulf %43, %50 : vector<16x128xf32>
    %52 = arith.truncf %51 : vector<16x128xf32> to vector<16x128xbf16>
    %c0_25 = arith.constant 0 : index
    %c0_26 = arith.constant 0 : index
    %53 = vector.load %arg8[%c0_25, %c0_26] : memref<128x256xbf16, #tpu.memory_space<vmem>>, vector<128x256xbf16>
    %cst_27 = arith.constant dense<0.000000e+00> : vector<16x256xf32>
    %54 = tpu.matmul %52, %53, %cst_27 {dimension_numbers = #tpu.dot_dimension_numbers<[1], [0], [0], [1], [0, 0, 1, 1], [], []>} : vector<16x128xbf16>, vector<128x256xbf16>, vector<16x256xf32> -> vector<16x256xf32>
    %c0_28 = arith.constant 0 : index
    %c0_29 = arith.constant 0 : index
    %55 = vector.load %arg9[%c0_28, %c0_29] : memref<16x256xf32, #tpu.memory_space<vmem>>, vector<16x256xf32>
    tpu.vector_store %arg9[%c0_28, %c0_29], %54 {strides = array<i32>} : memref<16x256xf32, #tpu.memory_space<vmem>>, vector<16x256xf32>,
    return
  }
  func.func @transform_0(%arg0: i32) -> (i32, i32) {
    %c0_i32 = arith.constant 0 : i32
    %c0_i32_0 = arith.constant 0 : i32
    return %arg0, %c0_i32 : i32, i32
  }
  func.func @transform_1(%arg0: i32) -> (i32, i32) {
    %c0_i32 = arith.constant 0 : i32
    %c0_i32_0 = arith.constant 0 : i32
    %c0_i32_1 = arith.constant 0 : i32
    return %c0_i32, %c0_i32_0 : i32, i32
  }
  func.func @transform_2(%arg0: i32) -> (i32, i32) {
    %c0_i32 = arith.constant 0 : i32
    %c0_i32_0 = arith.constant 0 : i32
    %c0_i32_1 = arith.constant 0 : i32
    return %c0_i32, %c0_i32_0 : i32, i32
  }
  func.func @transform_3(%arg0: i32) -> (i32, i32) {
    %c0_i32 = arith.constant 0 : i32
    %c0_i32_0 = arith.constant 0 : i32
    %c0_i32_1 = arith.constant 0 : i32
    return %c0_i32, %c0_i32_0 : i32, i32
  }
  func.func @transform_4(%arg0: i32) -> (i32, i32) {
    %c0_i32 = arith.constant 0 : i32
    %c0_i32_0 = arith.constant 0 : i32
    %c0_i32_1 = arith.constant 0 : i32
    return %c0_i32, %c0_i32_0 : i32, i32
  }
  func.func @transform_5(%arg0: i32) -> (i32, i32) {
    %c0_i32 = arith.constant 0 : i32
    %c0_i32_0 = arith.constant 0 : i32
    %c0_i32_1 = arith.constant 0 : i32
    return %c0_i32, %c0_i32_0 : i32, i32
  }
  func.func @transform_6(%arg0: i32) -> (i32, i32) {
    %c0_i32 = arith.constant 0 : i32
    %c0_i32_0 = arith.constant 0 : i32
    %c0_i32_1 = arith.constant 0 : i32
    return %c0_i32, %c0_i32_0 : i32, i32
  }
  func.func @transform_7(%arg0: i32) -> (i32, i32) {
    %c0_i32 = arith.constant 0 : i32
    %c0_i32_0 = arith.constant 0 : i32
    %c0_i32_1 = arith.constant 0 : i32
    return %c0_i32, %c0_i32_0 : i32, i32
  }
  func.func @transform_8(%arg0: i32) -> (i32, i32) {
    %c0_i32 = arith.constant 0 : i32
    %c0_i32_0 = arith.constant 0 : i32
    return %arg0, %c0_i32 : i32, i32
  }
}

</mosaic_0001>

<llo_original>
// kernel: tpu_custom_call.1
$region0: #{tpu_custom_call.1}
  #allocation0 [shape = 'u32[]', space=smem, size = 0x4, offset = 0x4, fixed_abs, tag = 'smem constant byte address 0x4 - core index']
  #allocation1 [shape = 'u32[144,128]{1,0:T(1,128)}', space=vmem, size = 0x12000, scoped, tag = 'internal scratch']
  %s0 = inlined_call_operand.hbm [shape: bf16[32,256], index: 0, kind: input, shape index: {}]
  %s1 = inlined_call_operand.hbm [shape: bf16[256,256], index: 1, kind: input, shape index: {}]
  %s2 = inlined_call_operand.vmem [shape: f32[1,256], index: 2, kind: input, shape index: {}]
  %s3 = inlined_call_operand.hbm [shape: bf16[256,256], index: 3, kind: input, shape index: {}]
  %s4 = inlined_call_operand.vmem [shape: f32[1,256], index: 4, kind: input, shape index: {}]
  %s5 = inlined_call_operand.hbm [shape: bf16[256,128], index: 5, kind: input, shape index: {}]
  %s6 = inlined_call_operand.vmem [shape: f32[1,128], index: 6, kind: input, shape index: {}]
  %s7 = inlined_call_operand.hbm [shape: bf16[128,256], index: 7, kind: input, shape index: {}]
  %s8 = inlined_call_operand.hbm [shape: f32[32,256], index: 8, kind: output, shape index: {}]
  %s9 = sld [smem:[#allocation0]]
  $region85: #{tpu_custom_call.1} parent=0
    _
  %s11 = ssub.s32 1, %s9
  %s12 = scalar_select 0, %s11, %s9
  $region1: #{tpu_custom_call.1} parent=0
    #allocation2 [shape = 'u8[16384]{0}', space=vmem, size = 0x4000, scoped, tag = 'input window, operand 0']
    #allocation3 [shape = 's32[2]{0}', space=sflag, size = 0x8, scoped, tag = 'scoped memory for tpu_custom_call.1']
    #allocation4 [shape = 's32[2]{0}', space=sflag, size = 0x8, scoped, tag = 'scoped memory for tpu_custom_call.1']
    #allocation5 [shape = 'u8[131072]{0}', space=vmem, size = 0x20000, scoped, tag = 'input window, operand 1, single buffered']
    #allocation6 [shape = 's32[1]{0}', space=sflag, size = 0x4, scoped, tag = 'scoped memory for tpu_custom_call.1']
    #allocation7 [shape = 'u8[131072]{0}', space=vmem, size = 0x20000, scoped, tag = 'input window, operand 3, single buffered']
    #allocation8 [shape = 'u8[65536]{0}', space=vmem, size = 0x10000, scoped, tag = 'input window, operand 5, single buffered']
    #allocation9 [shape = 's32[1]{0}', space=sflag, size = 0x4, scoped, tag = 'scoped memory for tpu_custom_call.1']
    #allocation10 [shape = 'u8[65536]{0}', space=vmem, size = 0x10000, scoped, tag = 'input window, operand 7, single buffered']
    #allocation11 [shape = 'u8[32768]{0}', space=vmem, size = 0x8000, scoped, tag = 'output window, operand 0']
    %13 = vsyncpa [#allocation3], 0
    %s14 = scalar_lea.sflag [#allocation3], 1
    %15 = vsyncpa %s14, 0
    %16 = vsyncpa [#allocation6], 0
    %17 = vsyncpa [#allocation9], 0
    %18 = vsyncpa [#allocation4], 0
    %s19 = scalar_lea.sflag [#allocation4], 1
    %20 = vsyncpa %s19, 0
    loop: start=0, step=1, limit=4
    $region2: #{tpu_custom_call.1} parent=1 // loop_pre_header
      _
    $region3: #{tpu_custom_call.1} parent=1 // loop_header
      %s22 = sphi 0, %s26
      %p23 = scmp.ge.s32.totalorder %s22, 4
      %s32 = sphi 0, %s34
      %s35 = sphi 0, %s32
      %s36 = sphi 0, %s35
      %s52 = sphi 0, %s36
      %s56 = sphi 0, %s56
      %s58 = sphi 0, %s56
      %s59 = sphi 0, %s58
      %s73 = sphi 0, %s59
      %s77 = sphi 0, %s77
      %s79 = sphi 0, %s77
      %s80 = sphi 0, %s79
      %s94 = sphi 0, %s80
      %s98 = sphi 0, %s98
      %s100 = sphi 0, %s98
      %s101 = sphi 0, %s100
      %s115 = sphi 0, %s101
      %s119 = sphi 0, %s119
      %s121 = sphi 0, %s119
      %s122 = sphi 0, %s121
      %s136 = sphi 0, %s122
      %s140 = sphi 0, %s140
      %s142 = sphi 0, %s140
      %s143 = sphi 0, %s142
      %s157 = sphi 0, %s143
      %s161 = sphi 0, %s161
      %s163 = sphi 0, %s161
      %s164 = sphi 0, %s163
      %s178 = sphi 0, %s164
      %s182 = sphi 0, %s182
      %s184 = sphi 0, %s182
      %s185 = sphi 0, %s184
      %s199 = sphi 0, %s185
      %s205 = sphi 0, %s207
      %s208 = sphi 0, %s205
      %s209 = sphi 0, %s208
      %s225 = sphi 0, %s209
    $region4: #{tpu_custom_call.1} parent=1 // loop_header_branch
      %25 = sbr.rel (%p23) target = $region8
    $region5: #{tpu_custom_call.1} parent=1 // loop_body
      %s27 = ssub.s32 %s22, 1
      %s28 = ssub.s32 %s22, 2
      %s29 = sadd.s32 %s22, 1
      %s30 = ssub.s32 %s22, %s29
      %p31 = scmp.eq.s32.totalorder %s30, 0
      %s33 = sadd.s32 %s32, 1
      %s34 = scalar_select %p31, %s32, %s33
      %p37 = pneg %p31
      %p38 = scmp.eq.s32.totalorder %s22, 1
      %p39 = por %p37, %p38
      %p40 = scmp.ne.s32.totalorder %s32, %s35
      %p41 = scmp.eq.s32.totalorder %s22, 0
      %p42 = por %p40, %p41
      %p43 = scmp.ne.s32.totalorder %s32, %s35
      %p44 = scmp.eq.s32.totalorder %s27, 1
      %p45 = por %p43, %p44
      %p46 = scmp.ne.s32.totalorder %s35, %s36
      %p47 = scmp.eq.s32.totalorder %s27, 0
      %p48 = por %p46, %p47
      %p49 = scmp.ne.s32.totalorder %s35, %s36
      %p50 = scmp.eq.s32.totalorder %s28, 1
      %p51 = por %p49, %p50
      %p53 = scmp.ne.s32.totalorder %s36, %s52
      %p54 = scmp.eq.s32.totalorder %s28, 0
      %p55 = por %p53, %p54
      %s57 = sadd.s32 %s56, 1
      %p60 = scmp.eq.s32.totalorder %s22, 1
      %p61 = scmp.ne.s32.totalorder %s56, %s58
      %p62 = scmp.eq.s32.totalorder %s22, 0
      %p63 = por %p61, %p62
      %p64 = scmp.ne.s32.totalorder %s56, %s58
      %p65 = scmp.eq.s32.totalorder %s27, 1
      %p66 = por %p64, %p65
      %p67 = scmp.ne.s32.totalorder %s58, %s59
      %p68 = scmp.eq.s32.totalorder %s27, 0
      %p69 = por %p67, %p68
      %p70 = scmp.ne.s32.totalorder %s58, %s59
      %p71 = scmp.eq.s32.totalorder %s28, 1
      %p72 = por %p70, %p71
      %p74 = scmp.ne.s32.totalorder %s59, %s73
      %p75 = scmp.eq.s32.totalorder %s28, 0
      %p76 = por %p74, %p75
      %s78 = sadd.s32 %s77, 1
      %p81 = scmp.eq.s32.totalorder %s22, 1
      %p82 = scmp.ne.s32.totalorder %s77, %s79
      %p83 = scmp.eq.s32.totalorder %s22, 0
      %p84 = por %p82, %p83
      %p85 = scmp.ne.s32.totalorder %s77, %s79
      %p86 = scmp.eq.s32.totalorder %s27, 1
      %p87 = por %p85, %p86
      %p88 = scmp.ne.s32.totalorder %s79, %s80
      %p89 = scmp.eq.s32.totalorder %s27, 0
      %p90 = por %p88, %p89
      %p91 = scmp.ne.s32.totalorder %s79, %s80
      %p92 = scmp.eq.s32.totalorder %s28, 1
      %p93 = por %p91, %p92
      %p95 = scmp.ne.s32.totalorder %s80, %s94
      %p96 = scmp.eq.s32.totalorder %s28, 0
      %p97 = por %p95, %p96
      %s99 = sadd.s32 %s98, 1
      %p102 = scmp.eq.s32.totalorder %s22, 1
      %p103 = scmp.ne.s32.totalorder %s98, %s100
      %p104 = scmp.eq.s32.totalorder %s22, 0
      %p105 = por %p103, %p104
      %p106 = scmp.ne.s32.totalorder %s98, %s100
      %p107 = scmp.eq.s32.totalorder %s27, 1
      %p108 = por %p106, %p107
      %p109 = scmp.ne.s32.totalorder %s100, %s101
      %p110 = scmp.eq.s32.totalorder %s27, 0
      %p111 = por %p109, %p110
      %p112 = scmp.ne.s32.totalorder %s100, %s101
      %p113 = scmp.eq.s32.totalorder %s28, 1
      %p114 = por %p112, %p113
      %p116 = scmp.ne.s32.totalorder %s101, %s115
      %p117 = scmp.eq.s32.totalorder %s28, 0
      %p118 = por %p116, %p117
      %s120 = sadd.s32 %s119, 1
      %p123 = scmp.eq.s32.totalorder %s22, 1
      %p124 = scmp.ne.s32.totalorder %s119, %s121
      %p125 = scmp.eq.s32.totalorder %s22, 0
      %p126 = por %p124, %p125
      %p127 = scmp.ne.s32.totalorder %s119, %s121
      %p128 = scmp.eq.s32.totalorder %s27, 1
      %p129 = por %p127, %p128
      %p130 = scmp.ne.s32.totalorder %s121, %s122
      %p131 = scmp.eq.s32.totalorder %s27, 0
      %p132 = por %p130, %p131
      %p133 = scmp.ne.s32.totalorder %s121, %s122
      %p134 = scmp.eq.s32.totalorder %s28, 1
      %p135 = por %p133, %p134
      %p137 = scmp.ne.s32.totalorder %s122, %s136
      %p138 = scmp.eq.s32.totalorder %s28, 0
      %p139 = por %p137, %p138
      %s141 = sadd.s32 %s140, 1
      %p144 = scmp.eq.s32.totalorder %s22, 1
      %p145 = scmp.ne.s32.totalorder %s140, %s142
      %p146 = scmp.eq.s32.totalorder %s22, 0
      %p147 = por %p145, %p146
      %p148 = scmp.ne.s32.totalorder %s140, %s142
      %p149 = scmp.eq.s32.totalorder %s27, 1
      %p150 = por %p148, %p149
      %p151 = scmp.ne.s32.totalorder %s142, %s143
      %p152 = scmp.eq.s32.totalorder %s27, 0
      %p153 = por %p151, %p152
      %p154 = scmp.ne.s32.totalorder %s142, %s143
      %p155 = scmp.eq.s32.totalorder %s28, 1
      %p156 = por %p154, %p155
      %p158 = scmp.ne.s32.totalorder %s143, %s157
      %p159 = scmp.eq.s32.totalorder %s28, 0
      %p160 = por %p158, %p159
      %s162 = sadd.s32 %s161, 1
      %p165 = scmp.eq.s32.totalorder %s22, 1
      %p166 = scmp.ne.s32.totalorder %s161, %s163
      %p167 = scmp.eq.s32.totalorder %s22, 0
      %p168 = por %p166, %p167
      %p169 = scmp.ne.s32.totalorder %s161, %s163
      %p170 = scmp.eq.s32.totalorder %s27, 1
      %p171 = por %p169, %p170
      %p172 = scmp.ne.s32.totalorder %s163, %s164
      %p173 = scmp.eq.s32.totalorder %s27, 0
      %p174 = por %p172, %p173
      %p175 = scmp.ne.s32.totalorder %s163, %s164
      %p176 = scmp.eq.s32.totalorder %s28, 1
      %p177 = por %p175, %p176
      %p179 = scmp.ne.s32.totalorder %s164, %s178
      %p180 = scmp.eq.s32.totalorder %s28, 0
      %p181 = por %p179, %p180
      %s183 = sadd.s32 %s182, 1
      %p186 = scmp.eq.s32.totalorder %s22, 1
      %p187 = scmp.ne.s32.totalorder %s182, %s184
      %p188 = scmp.eq.s32.totalorder %s22, 0
      %p189 = por %p187, %p188
      %p190 = scmp.ne.s32.totalorder %s182, %s184
      %p191 = scmp.eq.s32.totalorder %s27, 1
      %p192 = por %p190, %p191
      %p193 = scmp.ne.s32.totalorder %s184, %s185
      %p194 = scmp.eq.s32.totalorder %s27, 0
      %p195 = por %p193, %p194
      %p196 = scmp.ne.s32.totalorder %s184, %s185
      %p197 = scmp.eq.s32.totalorder %s28, 1
      %p198 = por %p196, %p197
      %p200 = scmp.ne.s32.totalorder %s185, %s199
      %p201 = scmp.eq.s32.totalorder %s28, 0
      %p202 = por %p200, %p201
      %s203 = ssub.s32 %s22, %s29
      %p204 = scmp.eq.s32.totalorder %s203, 0
      %s206 = sadd.s32 %s205, 1
      %s207 = scalar_select %p204, %s205, %s206
      %p210 = pneg %p204
      %p211 = scmp.eq.s32.totalorder %s22, 1
      %p212 = por %p210, %p211
      %p213 = scmp.ne.s32.totalorder %s205, %s208
      %p214 = scmp.eq.s32.totalorder %s22, 0
      %p215 = por %p213, %p214
      %p216 = scmp.ne.s32.totalorder %s205, %s208
      %p217 = scmp.eq.s32.totalorder %s27, 1
      %p218 = por %p216, %p217
      %p219 = scmp.ne.s32.totalorder %s208, %s209
      %p220 = scmp.eq.s32.totalorder %s27, 0
      %p221 = por %p219, %p220
      %p222 = scmp.ne.s32.totalorder %s208, %s209
      %p223 = scmp.eq.s32.totalorder %s28, 1
      %p224 = por %p222, %p223
      %p226 = scmp.ne.s32.totalorder %s209, %s225
      %p227 = scmp.eq.s32.totalorder %s28, 0
      %p228 = por %p226, %p227
      %p229 = scmp.le.s32.totalorder 1, %s22
      %p230 = scmp.lt.s32.totalorder %s22, 3
      %p231 = pnand %p229, %p230
      %p232 = pneg %p231
      // Predicated region
      $region9: #{tpu_custom_call.1} parent=5 // pred_check
        _
      $region10: #{tpu_custom_call.1} parent=5 // pred_check_branch
        %234 = sbr.rel (%p231) target = $region12
      $region11: #{tpu_custom_call.1} parent=5 // pred_region
        %s235 = ssub.s32 %s22, 1
        // Predicated region
        $region13: #{tpu_custom_call.1} parent=11 // pred_check
          %p236 = pneg %p69
        $region14: #{tpu_custom_call.1} parent=11 // pred_check_branch
          %238 = sbr.rel (%p236) target = $region16
        $region15: #{tpu_custom_call.1} parent=11 // pred_region
          %s240 = ssub.s32 4096, 4096
          %241 = vsyncadd [#allocation6], %s240
          %s242 = sshll.u32 [#allocation5], 4
          %s243 = int_to_ptr.vmem [resolvable:$true] %s242
          %248 = dma.hbm_to_vmem [thread:$0]  %s1, 4096, %s243, [#allocation6], 128, 128, 8
        $region16: #{tpu_custom_call.1} parent=11 // pred_fallthru
          _
        // Predicated region
        $region17: #{tpu_custom_call.1} parent=11 // pred_check
          %p249 = pneg %p90
        $region18: #{tpu_custom_call.1} parent=11 // pred_check_branch
          %251 = sbr.rel (%p249) target = $region20
        $region19: #{tpu_custom_call.1} parent=11 // pred_region
          _
        $region20: #{tpu_custom_call.1} parent=11 // pred_fallthru
          _
        // Predicated region
        $region21: #{tpu_custom_call.1} parent=11 // pred_check
          %p252 = pneg %p111
        $region22: #{tpu_custom_call.1} parent=11 // pred_check_branch
          %254 = sbr.rel (%p252) target = $region24
        $region23: #{tpu_custom_call.1} parent=11 // pred_region
          %s256 = ssub.s32 4096, 4096
          %257 = vsyncadd [#allocation6], %s256
          %s258 = sshll.u32 [#allocation7], 4
          %s259 = int_to_ptr.vmem [resolvable:$true] %s258
          %264 = dma.hbm_to_vmem [thread:$0]  %s3, 4096, %s259, [#allocation6], 128, 128, 8
        $region24: #{tpu_custom_call.1} parent=11 // pred_fallthru
          _
        // Predicated region
        $region25: #{tpu_custom_call.1} parent=11 // pred_check
          %p265 = pneg %p132
        $region26: #{tpu_custom_call.1} parent=11 // pred_check_branch
          %267 = sbr.rel (%p265) target = $region28
        $region27: #{tpu_custom_call.1} parent=11 // pred_region
          _
        $region28: #{tpu_custom_call.1} parent=11 // pred_fallthru
          _
        // Predicated region
        $region29: #{tpu_custom_call.1} parent=11 // pred_check
          %p268 = pneg %p153
        $region30: #{tpu_custom_call.1} parent=11 // pred_check_branch
          %270 = sbr.rel (%p268) target = $region32
        $region31: #{tpu_custom_call.1} parent=11 // pred_region
          %s272 = ssub.s32 2048, 2048
          %273 = vsyncadd [#allocation9], %s272
          %s274 = sshll.u32 [#allocation8], 4
          %s275 = int_to_ptr.vmem [resolvable:$true] %s274
          %280 = dma.hbm_to_vmem [thread:$0]  %s5, 2048, %s275, [#allocation9], 64, 64, 4
        $region32: #{tpu_custom_call.1} parent=11 // pred_fallthru
          _
        // Predicated region
        $region33: #{tpu_custom_call.1} parent=11 // pred_check
          %p281 = pneg %p174
        $region34: #{tpu_custom_call.1} parent=11 // pred_check_branch
          %283 = sbr.rel (%p281) target = $region36
        $region35: #{tpu_custom_call.1} parent=11 // pred_region
          _
        $region36: #{tpu_custom_call.1} parent=11 // pred_fallthru
          _
        // Predicated region
        $region37: #{tpu_custom_call.1} parent=11 // pred_check
          %p284 = pneg %p195
        $region38: #{tpu_custom_call.1} parent=11 // pred_check_branch
          %286 = sbr.rel (%p284) target = $region40
        $region39: #{tpu_custom_call.1} parent=11 // pred_region
          %s288 = ssub.s32 2048, 2048
          %289 = vsyncadd [#allocation9], %s288
          %s290 = sshll.u32 [#allocation10], 4
          %s291 = int_to_ptr.vmem [resolvable:$true] %s290
          %296 = dma.hbm_to_vmem [thread:$0]  %s7, 2048, %s291, [#allocation9], 128, 128, 8
        $region40: #{tpu_custom_call.1} parent=11 // pred_fallthru
          _
      $region12: #{tpu_custom_call.1} parent=5 // pred_fallthru
        _
      %p297 = scmp.lt.s32.totalorder %s22, 2
      // Predicated region
      $region41: #{tpu_custom_call.1} parent=5 // pred_check
        %p298 = pneg %p297
      $region42: #{tpu_custom_call.1} parent=5 // pred_check_branch
        %300 = sbr.rel (%p298) target = $region44
      $region43: #{tpu_custom_call.1} parent=5 // pred_region
        // Predicated region
        $region45: #{tpu_custom_call.1} parent=43 // pred_check
          %p301 = pneg %p42
        $region46: #{tpu_custom_call.1} parent=43 // pred_check_branch
          %303 = sbr.rel (%p301) target = $region48
        $region47: #{tpu_custom_call.1} parent=43 // pred_region
          %s304 = sand.u32 %s32, 1
          %s305 = scalar_lea.sflag [#allocation3], %s304
          %s306 = sand.u32 %s32, 1
          %s307 = smul.addr %s306, 16
          %s308 = scalar_lea.vmem [#allocation2], %s307
          %s309 = smul.u32 2, %s22
          %s311 = ssub.s32 256, 256
          %312 = vsyncadd %s305, %s311
          %s313 = smul.addr %s309, 2
          %s314 = smul.addr %s313, 64
          %s315 = scalar_lea.hbm %s0, %s314
          %s316 = sshll.u32 %s308, 4
          %s317 = int_to_ptr.vmem [resolvable:$true] %s316
          %322 = dma.hbm_to_vmem [thread:$0]  %s315, 256, %s317, %s305, 128, 128, 8
        $region48: #{tpu_custom_call.1} parent=43 // pred_fallthru
          _
      $region44: #{tpu_custom_call.1} parent=5 // pred_fallthru
        _
      %p323 = scmp.le.s32.totalorder 1, %s22
      %p324 = scmp.lt.s32.totalorder %s22, 3
      %p325 = pnand %p323, %p324
      %p326 = pneg %p325
      // Predicated region
      $region49: #{tpu_custom_call.1} parent=5 // pred_check
        _
      $region50: #{tpu_custom_call.1} parent=5 // pred_check_branch
        %328 = sbr.rel (%p325) target = $region52
      $region51: #{tpu_custom_call.1} parent=5 // pred_region
        %s329 = ssub.s32 %s22, 1
        %s330 = sand.u32 %s35, 1
        %s331 = scalar_lea.sflag [#allocation3], %s330
        %s332 = sand.u32 %s35, 1
        %s333 = smul.addr %s332, 16
        %s334 = scalar_lea.vmem [#allocation2], %s333
        // Predicated region
        $region53: #{tpu_custom_call.1} parent=51 // pred_check
          %p335 = pneg %p48
        $region54: #{tpu_custom_call.1} parent=51 // pred_check_branch
          %337 = sbr.rel (%p335) target = $region56
        $region55: #{tpu_custom_call.1} parent=51 // pred_region
          %338 = dma.done %s331, 256
        $region56: #{tpu_custom_call.1} parent=51 // pred_fallthru
          _
        // Predicated region
        $region57: #{tpu_custom_call.1} parent=51 // pred_check
          %p339 = pneg %p69
        $region58: #{tpu_custom_call.1} parent=51 // pred_check_branch
          %341 = sbr.rel (%p339) target = $region60
        $region59: #{tpu_custom_call.1} parent=51 // pred_region
          %342 = dma.done [#allocation6], 4096
        $region60: #{tpu_custom_call.1} parent=51 // pred_fallthru
          _
        // Predicated region
        $region61: #{tpu_custom_call.1} parent=51 // pred_check
          %p343 = pneg %p111
        $region62: #{tpu_custom_call.1} parent=51 // pred_check_branch
          %345 = sbr.rel (%p343) target = $region64
        $region63: #{tpu_custom_call.1} parent=51 // pred_region
          %346 = dma.done [#allocation6], 4096
        $region64: #{tpu_custom_call.1} parent=51 // pred_fallthru
          _
        // Predicated region
        $region65: #{tpu_custom_call.1} parent=51 // pred_check
          %p347 = pneg %p153
        $region66: #{tpu_custom_call.1} parent=51 // pred_check_branch
          %349 = sbr.rel (%p347) target = $region68
        $region67: #{tpu_custom_call.1} parent=51 // pred_region
          %350 = dma.done [#allocation9], 2048
        $region68: #{tpu_custom_call.1} parent=51 // pred_fallthru
          _
        // Predicated region
        $region69: #{tpu_custom_call.1} parent=51 // pred_check
          %p351 = pneg %p195
        $region70: #{tpu_custom_call.1} parent=51 // pred_check_branch
          %353 = sbr.rel (%p351) target = $region72
        $region71: #{tpu_custom_call.1} parent=51 // pred_region
          %354 = dma.done [#allocation9], 2048
        $region72: #{tpu_custom_call.1} parent=51 // pred_fallthru
          _
        %s355 = sand.u32 %s35, 1
        %s356 = scalar_lea.sflag [#allocation3], %s355
        %s357 = sand.u32 %s35, 1
        %s358 = smul.addr %s357, 16
        %s359 = scalar_lea.vmem [#allocation2], %s358
        %p360 = pneg %p48
        %p361 = pneg %p45
        %p362 = pneg %p69
        %p363 = pneg %p66
        %p364 = pneg %p90
        %p365 = pneg %p87
        %p366 = pneg %p111
        %p367 = pneg %p108
        %p368 = pneg %p132
        %p369 = pneg %p129
        %p370 = pneg %p153
        %p371 = pneg %p150
        %p372 = pneg %p174
        %p373 = pneg %p171
        %p374 = pneg %p195
        %p375 = pneg %p192
        %p376 = pneg %p221
        %p377 = pneg %p218
        %s378 = sand.u32 %s208, 1
        %s379 = scalar_lea.sflag [#allocation4], %s378
        %s380 = sand.u32 %s208, 1
        %s381 = smul.addr %s380, 32
        %s382 = scalar_lea.vmem [#allocation11], %s381
        %s383 = smul.u32 2, %s27
        %s384 = smul.u32 2, %s27
        %v386 = vld [vmem:[%s334] sm:$0xff]
        %v387 = vld [vmem:[%s334 + $0x8] sm:$0xff]
        %v388 = vld [vmem:[#allocation5] sm:$0xff]
        %v389 = vld [vmem:[#allocation5 + $0x8] sm:$0xff]
        %v390 = vld [vmem:[#allocation5 + $0x10] sm:$0xff]
        %v391 = vld [vmem:[#allocation5 + $0x18] sm:$0xff]
        %v392 = vld [vmem:[#allocation5 + $0x20] sm:$0xff]
        %v393 = vld [vmem:[#allocation5 + $0x28] sm:$0xff]
        %v394 = vld [vmem:[#allocation5 + $0x30] sm:$0xff]
        %v395 = vld [vmem:[#allocation5 + $0x38] sm:$0xff]
        %v396 = vld [vmem:[#allocation5 + $0x40] sm:$0xff]
        %v397 = vld [vmem:[#allocation5 + $0x48] sm:$0xff]
        %v398 = vld [vmem:[#allocation5 + $0x50] sm:$0xff]
        %v399 = vld [vmem:[#allocation5 + $0x58] sm:$0xff]
        %v400 = vld [vmem:[#allocation5 + $0x60] sm:$0xff]
        %v401 = vld [vmem:[#allocation5 + $0x68] sm:$0xff]
        %v402 = vld [vmem:[#allocation5 + $0x70] sm:$0xff]
        %v403 = vld [vmem:[#allocation5 + $0x78] sm:$0xff]
        %v404 = vld [vmem:[#allocation5 + $0x80] sm:$0xff]
        %v405 = vld [vmem:[#allocation5 + $0x88] sm:$0xff]
        %v406 = vld [vmem:[#allocation5 + $0x90] sm:$0xff]
        %v407 = vld [vmem:[#allocation5 + $0x98] sm:$0xff]
        %v408 = vld [vmem:[#allocation5 + $0xa0] sm:$0xff]
        %v409 = vld [vmem:[#allocation5 + $0xa8] sm:$0xff]
        %v410 = vld [vmem:[#allocation5 + $0xb0] sm:$0xff]
        %v411 = vld [vmem:[#allocation5 + $0xb8] sm:$0xff]
        %v412 = vld [vmem:[#allocation5 + $0xc0] sm:$0xff]
        %v413 = vld [vmem:[#allocation5 + $0xc8] sm:$0xff]
        %v414 = vld [vmem:[#allocation5 + $0xd0] sm:$0xff]
        %v415 = vld [vmem:[#allocation5 + $0xd8] sm:$0xff]
        %v416 = vld [vmem:[#allocation5 + $0xe0] sm:$0xff]
        %v417 = vld [vmem:[#allocation5 + $0xe8] sm:$0xff]
        %v418 = vld [vmem:[#allocation5 + $0xf0] sm:$0xff]
        %v419 = vld [vmem:[#allocation5 + $0xf8] sm:$0xff]
        %v420 = vld [vmem:[%s2] sm:$0x3]
        %v421 = vld [vmem:[#allocation7] sm:$0xff]
        %v422 = vld [vmem:[#allocation7 + $0x8] sm:$0xff]
        %v423 = vld [vmem:[#allocation7 + $0x10] sm:$0xff]
        %v424 = vld [vmem:[#allocation7 + $0x18] sm:$0xff]
        %v425 = vld [vmem:[#allocation7 + $0x20] sm:$0xff]
        %v426 = vld [vmem:[#allocation7 + $0x28] sm:$0xff]
        %v427 = vld [vmem:[#allocation7 + $0x30] sm:$0xff]
        %v428 = vld [vmem:[#allocation7 + $0x38] sm:$0xff]
        %v429 = vld [vmem:[#allocation7 + $0x40] sm:$0xff]
        %v430 = vld [vmem:[#allocation7 + $0x48] sm:$0xff]
        %v431 = vld [vmem:[#allocation7 + $0x50] sm:$0xff]
        %v432 = vld [vmem:[#allocation7 + $0x58] sm:$0xff]
        %v433 = vld [vmem:[#allocation7 + $0x60] sm:$0xff]
        %v434 = vld [vmem:[#allocation7 + $0x68] sm:$0xff]
        %v435 = vld [vmem:[#allocation7 + $0x70] sm:$0xff]
        %v436 = vld [vmem:[#allocation7 + $0x78] sm:$0xff]
        %v437 = vld [vmem:[#allocation7 + $0x80] sm:$0xff]
        %v438 = vld [vmem:[#allocation7 + $0x88] sm:$0xff]
        %v439 = vld [vmem:[#allocation7 + $0x90] sm:$0xff]
        %v440 = vld [vmem:[#allocation7 + $0x98] sm:$0xff]
        %v441 = vld [vmem:[#allocation7 + $0xa0] sm:$0xff]
        %v442 = vld [vmem:[#allocation7 + $0xa8] sm:$0xff]
        %v443 = vld [vmem:[#allocation7 + $0xb0] sm:$0xff]
        %v444 = vld [vmem:[#allocation7 + $0xb8] sm:$0xff]
        %v445 = vld [vmem:[#allocation7 + $0xc0] sm:$0xff]
        %v446 = vld [vmem:[#allocation7 + $0xc8] sm:$0xff]
        %v447 = vld [vmem:[#allocation7 + $0xd0] sm:$0xff]
        %v448 = vld [vmem:[#allocation7 + $0xd8] sm:$0xff]
        %v449 = vld [vmem:[#allocation7 + $0xe0] sm:$0xff]
        %v450 = vld [vmem:[#allocation7 + $0xe8] sm:$0xff]
        %v451 = vld [vmem:[#allocation7 + $0xf0] sm:$0xff]
        %v452 = vld [vmem:[#allocation7 + $0xf8] sm:$0xff]
        %v453 = vld [vmem:[%s4] sm:$0x3]
        %v454 = vld [vmem:[#allocation8] sm:$0xf]
        %v455 = vld [vmem:[#allocation8 + $0x4] sm:$0xf]
        %v456 = vld [vmem:[#allocation8 + $0x8] sm:$0xf]
        %v457 = vld [vmem:[#allocation8 + $0xc] sm:$0xf]
        %v458 = vld [vmem:[#allocation8 + $0x10] sm:$0xf]
        %v459 = vld [vmem:[#allocation8 + $0x14] sm:$0xf]
        %v460 = vld [vmem:[#allocation8 + $0x18] sm:$0xf]
        %v461 = vld [vmem:[#allocation8 + $0x1c] sm:$0xf]
        %v462 = vld [vmem:[#allocation8 + $0x20] sm:$0xf]
        %v463 = vld [vmem:[#allocation8 + $0x24] sm:$0xf]
        %v464 = vld [vmem:[#allocation8 + $0x28] sm:$0xf]
        %v465 = vld [vmem:[#allocation8 + $0x2c] sm:$0xf]
        %v466 = vld [vmem:[#allocation8 + $0x30] sm:$0xf]
        %v467 = vld [vmem:[#allocation8 + $0x34] sm:$0xf]
        %v468 = vld [vmem:[#allocation8 + $0x38] sm:$0xf]
        %v469 = vld [vmem:[#allocation8 + $0x3c] sm:$0xf]
        %v470 = vld [vmem:[#allocation8 + $0x40] sm:$0xf]
        %v471 = vld [vmem:[#allocation8 + $0x44] sm:$0xf]
        %v472 = vld [vmem:[#allocation8 + $0x48] sm:$0xf]
        %v473 = vld [vmem:[#allocation8 + $0x4c] sm:$0xf]
        %v474 = vld [vmem:[#allocation8 + $0x50] sm:$0xf]
        %v475 = vld [vmem:[#allocation8 + $0x54] sm:$0xf]
        %v476 = vld [vmem:[#allocation8 + $0x58] sm:$0xf]
        %v477 = vld [vmem:[#allocation8 + $0x5c] sm:$0xf]
        %v478 = vld [vmem:[#allocation8 + $0x60] sm:$0xf]
        %v479 = vld [vmem:[#allocation8 + $0x64] sm:$0xf]
        %v480 = vld [vmem:[#allocation8 + $0x68] sm:$0xf]
        %v481 = vld [vmem:[#allocation8 + $0x6c] sm:$0xf]
        %v482 = vld [vmem:[#allocation8 + $0x70] sm:$0xf]
        %v483 = vld [vmem:[#allocation8 + $0x74] sm:$0xf]
        %v484 = vld [vmem:[#allocation8 + $0x78] sm:$0xf]
        %v485 = vld [vmem:[#allocation8 + $0x7c] sm:$0xf]
        %v486 = vld [vmem:[%s6] sm:$0x1]
        %v488 = vlaneseq
        %v489 = vshrl.u32 %v488, 7
        %v490 = vsub.s32 0, %v489
        %v491 = vrot.slane %v420, %v490
        %v492 = vlaneseq
        %v493 = vshrl.u32 %v492, 7
        %v494 = vsub.s32 1, %v493
        %v495 = vrot.slane %v420, %v494
        %v500 = vunpack.c.l.b16 %v386
        %v501 = vunpack.c.h.b16 %v386
        %v502 = vunpack.c.l.b16 %v387
        %v503 = vunpack.c.h.b16 %v387
        %v504 = vpack.c.b16 %v502, %v500
        %v505 = vpack.c.b16 %v503, %v501
        %v540 = vunpack.c.l.b16 %v388
        %v541 = vunpack.c.h.b16 %v388
        %v542 = vunpack.c.l.b16 %v389
        %v543 = vunpack.c.h.b16 %v389
        %v544 = vunpack.c.l.b16 %v390
        %v545 = vunpack.c.h.b16 %v390
        %v546 = vunpack.c.l.b16 %v391
        %v547 = vunpack.c.h.b16 %v391
        %v548 = vunpack.c.l.b16 %v392
        %v549 = vunpack.c.h.b16 %v392
        %v550 = vunpack.c.l.b16 %v393
        %v551 = vunpack.c.h.b16 %v393
        %v552 = vunpack.c.l.b16 %v394
        %v553 = vunpack.c.h.b16 %v394
        %v554 = vunpack.c.l.b16 %v395
        %v555 = vunpack.c.h.b16 %v395
        %v556 = vunpack.c.l.b16 %v396
        %v557 = vunpack.c.h.b16 %v396
        %v558 = vunpack.c.l.b16 %v397
        %v559 = vunpack.c.h.b16 %v397
        %v560 = vunpack.c.l.b16 %v398
        %v561 = vunpack.c.h.b16 %v398
        %v562 = vunpack.c.l.b16 %v399
        %v563 = vunpack.c.h.b16 %v399
        %v564 = vunpack.c.l.b16 %v400
        %v565 = vunpack.c.h.b16 %v400
        %v566 = vunpack.c.l.b16 %v401
        %v567 = vunpack.c.h.b16 %v401
        %v568 = vunpack.c.l.b16 %v402
        %v569 = vunpack.c.h.b16 %v402
        %v570 = vunpack.c.l.b16 %v403
        %v571 = vunpack.c.h.b16 %v403
        %v572 = vunpack.c.l.b16 %v404
        %v573 = vunpack.c.h.b16 %v404
        %v574 = vunpack.c.l.b16 %v405
        %v575 = vunpack.c.h.b16 %v405
        %v576 = vunpack.c.l.b16 %v406
        %v577 = vunpack.c.h.b16 %v406
        %v578 = vunpack.c.l.b16 %v407
        %v579 = vunpack.c.h.b16 %v407
        %v580 = vunpack.c.l.b16 %v408
        %v581 = vunpack.c.h.b16 %v408
        %v582 = vunpack.c.l.b16 %v409
        %v583 = vunpack.c.h.b16 %v409
        %v584 = vunpack.c.l.b16 %v410
        %v585 = vunpack.c.h.b16 %v410
        %v586 = vunpack.c.l.b16 %v411
        %v587 = vunpack.c.h.b16 %v411
        %v588 = vunpack.c.l.b16 %v412
        %v589 = vunpack.c.h.b16 %v412
        %v590 = vunpack.c.l.b16 %v413
        %v591 = vunpack.c.h.b16 %v413
        %v592 = vunpack.c.l.b16 %v414
        %v593 = vunpack.c.h.b16 %v414
        %v594 = vunpack.c.l.b16 %v415
        %v595 = vunpack.c.h.b16 %v415
        %v596 = vunpack.c.l.b16 %v416
        %v597 = vunpack.c.h.b16 %v416
        %v598 = vunpack.c.l.b16 %v417
        %v599 = vunpack.c.h.b16 %v417
        %v600 = vunpack.c.l.b16 %v418
        %v601 = vunpack.c.h.b16 %v418
        %v602 = vunpack.c.l.b16 %v419
        %v603 = vunpack.c.h.b16 %v419
        %v604 = vpack.c.b16 %v542, %v540
        %v605 = vpack.c.b16 %v543, %v541
        %v606 = vpack.c.b16 %v546, %v544
        %v607 = vpack.c.b16 %v547, %v545
        %v608 = vpack.c.b16 %v550, %v548
        %v609 = vpack.c.b16 %v551, %v549
        %v610 = vpack.c.b16 %v554, %v552
        %v611 = vpack.c.b16 %v555, %v553
        %v612 = vpack.c.b16 %v558, %v556
        %v613 = vpack.c.b16 %v559, %v557
        %v614 = vpack.c.b16 %v562, %v560
        %v615 = vpack.c.b16 %v563, %v561
        %v616 = vpack.c.b16 %v566, %v564
        %v617 = vpack.c.b16 %v567, %v565
        %v618 = vpack.c.b16 %v570, %v568
        %v619 = vpack.c.b16 %v571, %v569
        %v620 = vpack.c.b16 %v574, %v572
        %v621 = vpack.c.b16 %v575, %v573
        %v622 = vpack.c.b16 %v578, %v576
        %v623 = vpack.c.b16 %v579, %v577
        %v624 = vpack.c.b16 %v582, %v580
        %v625 = vpack.c.b16 %v583, %v581
        %v626 = vpack.c.b16 %v586, %v584
        %v627 = vpack.c.b16 %v587, %v585
        %v628 = vpack.c.b16 %v590, %v588
        %v629 = vpack.c.b16 %v591, %v589
        %v630 = vpack.c.b16 %v594, %v592
        %v631 = vpack.c.b16 %v595, %v593
        %v632 = vpack.c.b16 %v598, %v596
        %v633 = vpack.c.b16 %v599, %v597
        %v634 = vpack.c.b16 %v602, %v600
        %v635 = vpack.c.b16 %v603, %v601
        %668 = vmatprep.subr.bf16.mxu0 %v619
        %669 = vmatpush1.bf16.msra.mxu0 %v618
        %670 = vmatprep.subr.bf16.mxu0 %v617
        %671 = vmatpush1.bf16.msra.mxu0 %v616
        %672 = vmatprep.subr.bf16.mxu0 %v615
        %673 = vmatpush1.bf16.msra.mxu0 %v614
        %674 = vmatprep.subr.bf16.mxu0 %v613
        %675 = vmatpush1.bf16.msra.mxu0 %v612
        %676 = vmatprep.subr.bf16.mxu0 %v611
        %677 = vmatpush1.bf16.msra.mxu0 %v610
        %678 = vmatprep.subr.bf16.mxu0 %v609
        %679 = vmatpush1.bf16.msra.mxu0 %v608
        %680 = vmatprep.subr.bf16.mxu0 %v607
        %681 = vmatpush1.bf16.msra.mxu0 %v606
        %682 = vmatprep.subr.bf16.mxu0 %v605
        %683 = vmatpush1.bf16.msra.mxu0 %v604
        %684 = vmatprep.subr.bf16.mxu0 %v635
        %685 = vmatpush2.bf16.msra.mxu0 %v634
        %686 = vmatprep.subr.bf16.mxu0 %v633
        %687 = vmatpush2.bf16.msra.mxu0 %v632
        %688 = vmatprep.subr.bf16.mxu0 %v631
        %689 = vmatpush2.bf16.msra.mxu0 %v630
        %690 = vmatprep.subr.bf16.mxu0 %v629
        %691 = vmatpush2.bf16.msra.mxu0 %v628
        %692 = vmatprep.subr.bf16.mxu0 %v627
        %693 = vmatpush2.bf16.msra.mxu0 %v626
        %694 = vmatprep.subr.bf16.mxu0 %v625
        %695 = vmatpush2.bf16.msra.mxu0 %v624
        %696 = vmatprep.subr.bf16.mxu0 %v623
        %697 = vmatpush2.bf16.msra.mxu0 %v622
        %698 = vmatprep.subr.bf16.mxu0 %v621
        %699 = vmatpush2.bf16.msra.mxu0 %v620
        %700 = vmatprep.mubr.bf16.mxu0 %v505
        %701 = vmatmul.mubr.bf16.gmra.mxu0 %v504
        %v702 = vpop.f32.mrf.mxu0
        %v703 = vadd.f32 %v491, %v702
        %v704 = vpop.f32.mrf.mxu0
        %v705 = vadd.f32 %v495, %v704
        %v706 = vpop.f32.mrf.mxu0
        %v707 = vadd.f32 %v491, %v706
        %v708 = vpop.f32.mrf.mxu0
        %v709 = vadd.f32 %v495, %v708
        %710 = vdwg.mxu0
        %v711 = vmul.f32 %v703, %v703
        %v712 = vmul.f32 %v705, %v705
        %v713 = vmul.f32 %v707, %v707
        %v714 = vmul.f32 %v709, %v709
        %v715 = vmul.f32 %v703, %v711
        %v716 = vmul.f32 %v705, %v712
        %v717 = vmul.f32 %v707, %v713
        %v718 = vmul.f32 %v709, %v714
        %v719 = vmul.f32 %v715, 0.044715
        %v720 = vmul.f32 %v716, 0.044715
        %v721 = vmul.f32 %v717, 0.044715
        %v722 = vmul.f32 %v718, 0.044715
        %v723 = vadd.f32 %v703, %v719
        %v724 = vadd.f32 %v705, %v720
        %v725 = vadd.f32 %v707, %v721
        %v726 = vadd.f32 %v709, %v722
        %v727 = vmul.f32 %v723, 0.7978846
        %v728 = vmul.f32 %v724, 0.7978846
        %v729 = vmul.f32 %v725, 0.7978846
        %v730 = vmul.f32 %v726, 0.7978846
        %v731 = vtanh.pop %v727
        %v732 = vtanh.pop %v728
        %v733 = vtanh.pop %v729
        %v734 = vtanh.pop %v730
        %v735 = vadd.f32 %v731, 1.0
        %v736 = vadd.f32 %v732, 1.0
        %v737 = vadd.f32 %v733, 1.0
        %v738 = vadd.f32 %v734, 1.0
        %v739 = vmul.f32 %v735, 0.5
        %v740 = vmul.f32 %v736, 0.5
        %v741 = vmul.f32 %v737, 0.5
        %v742 = vmul.f32 %v738, 0.5
        %v743 = vmul.f32 %v703, %v739
        %v744 = vmul.f32 %v705, %v740
        %v745 = vmul.f32 %v707, %v741
        %v746 = vmul.f32 %v709, %v742
        %v747 = vpack.c.bf16 %v745, %v743
        %v748 = vpack.c.bf16 %v746, %v744
        %v750 = vlaneseq
        %v751 = vshrl.u32 %v750, 7
        %v752 = vsub.s32 0, %v751
        %v753 = vrot.slane %v453, %v752
        %v754 = vlaneseq
        %v755 = vshrl.u32 %v754, 7
        %v756 = vsub.s32 1, %v755
        %v757 = vrot.slane %v453, %v756
        %v792 = vunpack.c.l.b16 %v421
        %v793 = vunpack.c.h.b16 %v421
        %v794 = vunpack.c.l.b16 %v422
        %v795 = vunpack.c.h.b16 %v422
        %v796 = vunpack.c.l.b16 %v423
        %v797 = vunpack.c.h.b16 %v423
        %v798 = vunpack.c.l.b16 %v424
        %v799 = vunpack.c.h.b16 %v424
        %v800 = vunpack.c.l.b16 %v425
        %v801 = vunpack.c.h.b16 %v425
        %v802 = vunpack.c.l.b16 %v426
        %v803 = vunpack.c.h.b16 %v426
        %v804 = vunpack.c.l.b16 %v427
        %v805 = vunpack.c.h.b16 %v427
        %v806 = vunpack.c.l.b16 %v428
        %v807 = vunpack.c.h.b16 %v428
        %v808 = vunpack.c.l.b16 %v429
        %v809 = vunpack.c.h.b16 %v429
        %v810 = vunpack.c.l.b16 %v430
        %v811 = vunpack.c.h.b16 %v430
        %v812 = vunpack.c.l.b16 %v431
        %v813 = vunpack.c.h.b16 %v431
        %v814 = vunpack.c.l.b16 %v432
        %v815 = vunpack.c.h.b16 %v432
        %v816 = vunpack.c.l.b16 %v433
        %v817 = vunpack.c.h.b16 %v433
        %v818 = vunpack.c.l.b16 %v434
        %v819 = vunpack.c.h.b16 %v434
        %v820 = vunpack.c.l.b16 %v435
        %v821 = vunpack.c.h.b16 %v435
        %v822 = vunpack.c.l.b16 %v436
        %v823 = vunpack.c.h.b16 %v436
        %v824 = vunpack.c.l.b16 %v437
        %v825 = vunpack.c.h.b16 %v437
        %v826 = vunpack.c.l.b16 %v438
        %v827 = vunpack.c.h.b16 %v438
        %v828 = vunpack.c.l.b16 %v439
        %v829 = vunpack.c.h.b16 %v439
        %v830 = vunpack.c.l.b16 %v440
        %v831 = vunpack.c.h.b16 %v440
        %v832 = vunpack.c.l.b16 %v441
        %v833 = vunpack.c.h.b16 %v441
        %v834 = vunpack.c.l.b16 %v442
        %v835 = vunpack.c.h.b16 %v442
        %v836 = vunpack.c.l.b16 %v443
        %v837 = vunpack.c.h.b16 %v443
        %v838 = vunpack.c.l.b16 %v444
        %v839 = vunpack.c.h.b16 %v444
        %v840 = vunpack.c.l.b16 %v445
        %v841 = vunpack.c.h.b16 %v445
        %v842 = vunpack.c.l.b16 %v446
        %v843 = vunpack.c.h.b16 %v446
        %v844 = vunpack.c.l.b16 %v447
        %v845 = vunpack.c.h.b16 %v447
        %v846 = vunpack.c.l.b16 %v448
        %v847 = vunpack.c.h.b16 %v448
        %v848 = vunpack.c.l.b16 %v449
        %v849 = vunpack.c.h.b16 %v449
        %v850 = vunpack.c.l.b16 %v450
        %v851 = vunpack.c.h.b16 %v450
        %v852 = vunpack.c.l.b16 %v451
        %v853 = vunpack.c.h.b16 %v451
        %v854 = vunpack.c.l.b16 %v452
        %v855 = vunpack.c.h.b16 %v452
        %v856 = vpack.c.b16 %v794, %v792
        %v857 = vpack.c.b16 %v795, %v793
        %v858 = vpack.c.b16 %v798, %v796
        %v859 = vpack.c.b16 %v799, %v797
        %v860 = vpack.c.b16 %v802, %v800
        %v861 = vpack.c.b16 %v803, %v801
        %v862 = vpack.c.b16 %v806, %v804
        %v863 = vpack.c.b16 %v807, %v805
        %v864 = vpack.c.b16 %v810, %v808
        %v865 = vpack.c.b16 %v811, %v809
        %v866 = vpack.c.b16 %v814, %v812
        %v867 = vpack.c.b16 %v815, %v813
        %v868 = vpack.c.b16 %v818, %v816
        %v869 = vpack.c.b16 %v819, %v817
        %v870 = vpack.c.b16 %v822, %v820
        %v871 = vpack.c.b16 %v823, %v821
        %v872 = vpack.c.b16 %v826, %v824
        %v873 = vpack.c.b16 %v827, %v825
        %v874 = vpack.c.b16 %v830, %v828
        %v875 = vpack.c.b16 %v831, %v829
        %v876 = vpack.c.b16 %v834, %v832
        %v877 = vpack.c.b16 %v835, %v833
        %v878 = vpack.c.b16 %v838, %v836
        %v879 = vpack.c.b16 %v839, %v837
        %v880 = vpack.c.b16 %v842, %v840
        %v881 = vpack.c.b16 %v843, %v841
        %v882 = vpack.c.b16 %v846, %v844
        %v883 = vpack.c.b16 %v847, %v845
        %v884 = vpack.c.b16 %v850, %v848
        %v885 = vpack.c.b16 %v851, %v849
        %v886 = vpack.c.b16 %v854, %v852
        %v887 = vpack.c.b16 %v855, %v853
        %920 = vmatprep.subr.bf16.mxu0 %v871
        %921 = vmatpush1.bf16.msra.mxu0 %v870
        %922 = vmatprep.subr.bf16.mxu0 %v869
        %923 = vmatpush1.bf16.msra.mxu0 %v868
        %924 = vmatprep.subr.bf16.mxu0 %v867
        %925 = vmatpush1.bf16.msra.mxu0 %v866
        %926 = vmatprep.subr.bf16.mxu0 %v865
        %927 = vmatpush1.bf16.msra.mxu0 %v864
        %928 = vmatprep.subr.bf16.mxu0 %v863
        %929 = vmatpush1.bf16.msra.mxu0 %v862
        %930 = vmatprep.subr.bf16.mxu0 %v861
        %931 = vmatpush1.bf16.msra.mxu0 %v860
        %932 = vmatprep.subr.bf16.mxu0 %v859
        %933 = vmatpush1.bf16.msra.mxu0 %v858
        %934 = vmatprep.subr.bf16.mxu0 %v857
        %935 = vmatpush1.bf16.msra.mxu0 %v856
        %936 = vmatprep.subr.bf16.mxu0 %v887
        %937 = vmatpush2.bf16.msra.mxu0 %v886
        %938 = vmatprep.subr.bf16.mxu0 %v885
        %939 = vmatpush2.bf16.msra.mxu0 %v884
        %940 = vmatprep.subr.bf16.mxu0 %v883
        %941 = vmatpush2.bf16.msra.mxu0 %v882
        %942 = vmatprep.subr.bf16.mxu0 %v881
        %943 = vmatpush2.bf16.msra.mxu0 %v880
        %944 = vmatprep.subr.bf16.mxu0 %v879
        %945 = vmatpush2.bf16.msra.mxu0 %v878
        %946 = vmatprep.subr.bf16.mxu0 %v877
        %947 = vmatpush2.bf16.msra.mxu0 %v876
        %948 = vmatprep.subr.bf16.mxu0 %v875
        %949 = vmatpush2.bf16.msra.mxu0 %v874
        %950 = vmatprep.subr.bf16.mxu0 %v873
        %951 = vmatpush2.bf16.msra.mxu0 %v872
        %952 = vmatprep.mubr.bf16.mxu0 %v748
        %953 = vmatmul.mubr.bf16.gmra.mxu0 %v747
        %v954 = vpop.f32.mrf.mxu0
        %v955 = vadd.f32 %v753, %v954
        %v956 = vpop.f32.mrf.mxu0
        %v957 = vadd.f32 %v757, %v956
        %v958 = vpop.f32.mrf.mxu0
        %v959 = vadd.f32 %v753, %v958
        %v960 = vpop.f32.mrf.mxu0
        %v961 = vadd.f32 %v757, %v960
        %962 = vdwg.mxu0
        %v963 = vmul.f32 %v955, %v955
        %v964 = vmul.f32 %v957, %v957
        %v965 = vmul.f32 %v959, %v959
        %v966 = vmul.f32 %v961, %v961
        %v967 = vmul.f32 %v955, %v963
        %v968 = vmul.f32 %v957, %v964
        %v969 = vmul.f32 %v959, %v965
        %v970 = vmul.f32 %v961, %v966
        %v971 = vmul.f32 %v967, 0.044715
        %v972 = vmul.f32 %v968, 0.044715
        %v973 = vmul.f32 %v969, 0.044715
        %v974 = vmul.f32 %v970, 0.044715
        %v975 = vadd.f32 %v955, %v971
        %v976 = vadd.f32 %v957, %v972
        %v977 = vadd.f32 %v959, %v973
        %v978 = vadd.f32 %v961, %v974
        %v979 = vmul.f32 %v975, 0.7978846
        %v980 = vmul.f32 %v976, 0.7978846
        %v981 = vmul.f32 %v977, 0.7978846
        %v982 = vmul.f32 %v978, 0.7978846
        %v983 = vtanh.pop %v979
        %v984 = vtanh.pop %v980
        %v985 = vtanh.pop %v981
        %v986 = vtanh.pop %v982
        %v987 = vadd.f32 %v983, 1.0
        %v988 = vadd.f32 %v984, 1.0
        %v989 = vadd.f32 %v985, 1.0
        %v990 = vadd.f32 %v986, 1.0
        %v991 = vmul.f32 %v987, 0.5
        %v992 = vmul.f32 %v988, 0.5
        %v993 = vmul.f32 %v989, 0.5
        %v994 = vmul.f32 %v990, 0.5
        %v995 = vmul.f32 %v955, %v991
        %v996 = vmul.f32 %v957, %v992
        %v997 = vmul.f32 %v959, %v993
        %v998 = vmul.f32 %v961, %v994
        %v999 = vpack.c.bf16 %v997, %v995
        %v1000 = vpack.c.bf16 %v998, %v996
        %v1002 = vlaneseq
        %v1003 = vshrl.u32 %v1002, 7
        %v1004 = vsub.s32 0, %v1003
        %v1005 = vrot.slane %v486, %v1004
        %v1039 = vunpack.c.l.b16 %v454
        %v1040 = vunpack.c.l.b16 %v455
        %v1041 = vunpack.c.l.b16 %v456
        %v1042 = vunpack.c.l.b16 %v457
        %v1043 = vunpack.c.l.b16 %v458
        %v1044 = vunpack.c.l.b16 %v459
        %v1045 = vunpack.c.l.b16 %v460
        %v1046 = vunpack.c.l.b16 %v461
        %v1047 = vunpack.c.l.b16 %v462
        %v1048 = vunpack.c.l.b16 %v463
        %v1049 = vunpack.c.l.b16 %v464
        %v1050 = vunpack.c.l.b16 %v465
        %v1051 = vunpack.c.l.b16 %v466
        %v1052 = vunpack.c.l.b16 %v467
        %v1053 = vunpack.c.l.b16 %v468
        %v1054 = vunpack.c.l.b16 %v469
        %v1055 = vunpack.c.l.b16 %v470
        %v1056 = vunpack.c.l.b16 %v471
        %v1057 = vunpack.c.l.b16 %v472
        %v1058 = vunpack.c.l.b16 %v473
        %v1059 = vunpack.c.l.b16 %v474
        %v1060 = vunpack.c.l.b16 %v475
        %v1061 = vunpack.c.l.b16 %v476
        %v1062 = vunpack.c.l.b16 %v477
        %v1063 = vunpack.c.l.b16 %v478
        %v1064 = vunpack.c.l.b16 %v479
        %v1065 = vunpack.c.l.b16 %v480
        %v1066 = vunpack.c.l.b16 %v481
        %v1067 = vunpack.c.l.b16 %v482
        %v1068 = vunpack.c.l.b16 %v483
        %v1069 = vunpack.c.l.b16 %v484
        %v1070 = vunpack.c.l.b16 %v485
        %v1071 = vpack.c.b16 %v1040, %v1039
        %v1072 = vpack.c.b16 %v1042, %v1041
        %v1073 = vpack.c.b16 %v1044, %v1043
        %v1074 = vpack.c.b16 %v1046, %v1045
        %v1075 = vpack.c.b16 %v1048, %v1047
        %v1076 = vpack.c.b16 %v1050, %v1049
        %v1077 = vpack.c.b16 %v1052, %v1051
        %v1078 = vpack.c.b16 %v1054, %v1053
        %v1079 = vpack.c.b16 %v1056, %v1055
        %v1080 = vpack.c.b16 %v1058, %v1057
        %v1081 = vpack.c.b16 %v1060, %v1059
        %v1082 = vpack.c.b16 %v1062, %v1061
        %v1083 = vpack.c.b16 %v1064, %v1063
        %v1084 = vpack.c.b16 %v1066, %v1065
        %v1085 = vpack.c.b16 %v1068, %v1067
        %v1086 = vpack.c.b16 %v1070, %v1069
        %1103 = vmatprep.subr.bf16.mxu0 0
        %1104 = vmatpush1.bf16.msra.mxu0 %v1078
        %1105 = vmatprep.subr.bf16.mxu0 0
        %1106 = vmatpush1.bf16.msra.mxu0 %v1077
        %1107 = vmatprep.subr.bf16.mxu0 0
        %1108 = vmatpush1.bf16.msra.mxu0 %v1076
        %1109 = vmatprep.subr.bf16.mxu0 0
        %1110 = vmatpush1.bf16.msra.mxu0 %v1075
        %1111 = vmatprep.subr.bf16.mxu0 0
        %1112 = vmatpush1.bf16.msra.mxu0 %v1074
        %1113 = vmatprep.subr.bf16.mxu0 0
        %1114 = vmatpush1.bf16.msra.mxu0 %v1073
        %1115 = vmatprep.subr.bf16.mxu0 0
        %1116 = vmatpush1.bf16.msra.mxu0 %v1072
        %1117 = vmatprep.subr.bf16.mxu0 0
        %1118 = vmatpush1.bf16.msra.mxu0 %v1071
        %1119 = vmatprep.subr.bf16.mxu0 0
        %1120 = vmatpush2.bf16.msra.mxu0 %v1086
        %1121 = vmatprep.subr.bf16.mxu0 0
        %1122 = vmatpush2.bf16.msra.mxu0 %v1085
        %1123 = vmatprep.subr.bf16.mxu0 0
        %1124 = vmatpush2.bf16.msra.mxu0 %v1084
        %1125 = vmatprep.subr.bf16.mxu0 0
        %1126 = vmatpush2.bf16.msra.mxu0 %v1083
        %1127 = vmatprep.subr.bf16.mxu0 0
        %1128 = vmatpush2.bf16.msra.mxu0 %v1082
        %1129 = vmatprep.subr.bf16.mxu0 0
        %1130 = vmatpush2.bf16.msra.mxu0 %v1081
        %1131 = vmatprep.subr.bf16.mxu0 0
        %1132 = vmatpush2.bf16.msra.mxu0 %v1080
        %1133 = vmatprep.subr.bf16.mxu0 0
        %1134 = vmatpush2.bf16.msra.mxu0 %v1079
        %1135 = vmatprep.mubr.bf16.mxu0 %v1000
        %1136 = vmatmul.mubr.bf16.gmra.mxu0 %v999
        %v1137 = vpop.f32.mrf.mxu0
        %v1138 = vadd.f32 %v1005, %v1137
        %v1139 = vpop.f32.mrf.mxu0
        %v1140 = vpop.f32.mrf.mxu0
        %v1141 = vadd.f32 %v1005, %v1140
        %v1142 = vpop.f32.mrf.mxu0
        %1143 = vdwg.mxu0
        %v1144 = vmul.f32 %v1138, %v1138
        %v1145 = vmul.f32 %v1141, %v1141
        %1146 = vadd.xlane.f32.xlu0 %v1144
        %v1147 = vpop.xlane.xlu0 %1146
        %1148 = vadd.xlane.f32.xlu0 %v1145
        %v1149 = vpop.xlane.xlu0 %1148
        %v1150 = vmax.f32 %v1147, 1e-24
        %v1151 = vmax.f32 %v1149, 1e-24
        %v1152 = vrsqrt.pop %v1150
        %v1153 = vrsqrt.pop %v1151
        %v1154 = vmul.f32 %v1138, %v1152
        %v1155 = vmul.f32 %v1141, %v1153
        %v1156 = vpack.c.bf16 %v1155, %v1154
        %v1157 = vld [vmem:[#allocation10] sm:$0xff]
        %v1158 = vld [vmem:[#allocation10 + $0x8] sm:$0xff]
        %v1159 = vld [vmem:[#allocation10 + $0x10] sm:$0xff]
        %v1160 = vld [vmem:[#allocation10 + $0x18] sm:$0xff]
        %v1161 = vld [vmem:[#allocation10 + $0x20] sm:$0xff]
        %v1162 = vld [vmem:[#allocation10 + $0x28] sm:$0xff]
        %v1163 = vld [vmem:[#allocation10 + $0x30] sm:$0xff]
        %v1164 = vld [vmem:[#allocation10 + $0x38] sm:$0xff]
        %v1165 = vld [vmem:[#allocation10 + $0x40] sm:$0xff]
        %v1166 = vld [vmem:[#allocation10 + $0x48] sm:$0xff]
        %v1167 = vld [vmem:[#allocation10 + $0x50] sm:$0xff]
        %v1168 = vld [vmem:[#allocation10 + $0x58] sm:$0xff]
        %v1169 = vld [vmem:[#allocation10 + $0x60] sm:$0xff]
        %v1170 = vld [vmem:[#allocation10 + $0x68] sm:$0xff]
        %v1171 = vld [vmem:[#allocation10 + $0x70] sm:$0xff]
        %v1172 = vld [vmem:[#allocation10 + $0x78] sm:$0xff]
        %v1189 = vunpack.c.l.b16 %v1157
        %v1190 = vunpack.c.h.b16 %v1157
        %v1191 = vunpack.c.l.b16 %v1158
        %v1192 = vunpack.c.h.b16 %v1158
        %v1193 = vunpack.c.l.b16 %v1159
        %v1194 = vunpack.c.h.b16 %v1159
        %v1195 = vunpack.c.l.b16 %v1160
        %v1196 = vunpack.c.h.b16 %v1160
        %v1197 = vunpack.c.l.b16 %v1161
        %v1198 = vunpack.c.h.b16 %v1161
        %v1199 = vunpack.c.l.b16 %v1162
        %v1200 = vunpack.c.h.b16 %v1162
        %v1201 = vunpack.c.l.b16 %v1163
        %v1202 = vunpack.c.h.b16 %v1163
        %v1203 = vunpack.c.l.b16 %v1164
        %v1204 = vunpack.c.h.b16 %v1164
        %v1205 = vunpack.c.l.b16 %v1165
        %v1206 = vunpack.c.h.b16 %v1165
        %v1207 = vunpack.c.l.b16 %v1166
        %v1208 = vunpack.c.h.b16 %v1166
        %v1209 = vunpack.c.l.b16 %v1167
        %v1210 = vunpack.c.h.b16 %v1167
        %v1211 = vunpack.c.l.b16 %v1168
        %v1212 = vunpack.c.h.b16 %v1168
        %v1213 = vunpack.c.l.b16 %v1169
        %v1214 = vunpack.c.h.b16 %v1169
        %v1215 = vunpack.c.l.b16 %v1170
        %v1216 = vunpack.c.h.b16 %v1170
        %v1217 = vunpack.c.l.b16 %v1171
        %v1218 = vunpack.c.h.b16 %v1171
        %v1219 = vunpack.c.l.b16 %v1172
        %v1220 = vunpack.c.h.b16 %v1172
        %v1221 = vpack.c.b16 %v1191, %v1189
        %v1222 = vpack.c.b16 %v1192, %v1190
        %v1223 = vpack.c.b16 %v1195, %v1193
        %v1224 = vpack.c.b16 %v1196, %v1194
        %v1225 = vpack.c.b16 %v1199, %v1197
        %v1226 = vpack.c.b16 %v1200, %v1198
        %v1227 = vpack.c.b16 %v1203, %v1201
        %v1228 = vpack.c.b16 %v1204, %v1202
        %v1229 = vpack.c.b16 %v1207, %v1205
        %v1230 = vpack.c.b16 %v1208, %v1206
        %v1231 = vpack.c.b16 %v1211, %v1209
        %v1232 = vpack.c.b16 %v1212, %v1210
        %v1233 = vpack.c.b16 %v1215, %v1213
        %v1234 = vpack.c.b16 %v1216, %v1214
        %v1235 = vpack.c.b16 %v1219, %v1217
        %v1236 = vpack.c.b16 %v1220, %v1218
        %1253 = vmatprep.subr.bf16.mxu0 %v1236
        %1254 = vmatpush1.bf16.msra.mxu0 %v1235
        %1255 = vmatprep.subr.bf16.mxu0 %v1234
        %1256 = vmatpush1.bf16.msra.mxu0 %v1233
        %1257 = vmatprep.subr.bf16.mxu0 %v1232
        %1258 = vmatpush1.bf16.msra.mxu0 %v1231
        %1259 = vmatprep.subr.bf16.mxu0 %v1230
        %1260 = vmatpush1.bf16.msra.mxu0 %v1229
        %1261 = vmatprep.subr.bf16.mxu0 %v1228
        %1262 = vmatpush1.bf16.msra.mxu0 %v1227
        %1263 = vmatprep.subr.bf16.mxu0 %v1226
        %1264 = vmatpush1.bf16.msra.mxu0 %v1225
        %1265 = vmatprep.subr.bf16.mxu0 %v1224
        %1266 = vmatpush1.bf16.msra.mxu0 %v1223
        %1267 = vmatprep.subr.bf16.mxu0 %v1222
        %1268 = vmatpush1.bf16.msra.mxu0 %v1221
        %1269 = vmatprep.subr.bf16.mxu0 0
        %1270 = vmatpush2.bf16.msra.mxu0 0
        %1271 = vmatprep.subr.bf16.mxu0 0
        %1272 = vmatpush2.bf16.msra.mxu0 0
        %1273 = vmatprep.subr.bf16.mxu0 0
        %1274 = vmatpush2.bf16.msra.mxu0 0
        %1275 = vmatprep.subr.bf16.mxu0 0
        %1276 = vmatpush2.bf16.msra.mxu0 0
        %1277 = vmatprep.subr.bf16.mxu0 0
        %1278 = vmatpush2.bf16.msra.mxu0 0
        %1279 = vmatprep.subr.bf16.mxu0 0
        %1280 = vmatpush2.bf16.msra.mxu0 0
        %1281 = vmatprep.subr.bf16.mxu0 0
        %1282 = vmatpush2.bf16.msra.mxu0 0
        %1283 = vmatprep.subr.bf16.mxu0 0
        %1284 = vmatpush2.bf16.msra.mxu0 0
        %1285 = vmatprep.mubr.bf16.mxu0 0
        %1286 = vmatmul.mubr.bf16.gmra.mxu0 %v1156
        %v1287 = vpop.f32.mrf.mxu0
        %v1288 = vadd.f32 0.0, %v1287
        %v1289 = vpop.f32.mrf.mxu0
        %v1290 = vadd.f32 0.0, %v1289
        %v1291 = vpop.f32.mrf.mxu0
        %v1292 = vadd.f32 0.0, %v1291
        %v1293 = vpop.f32.mrf.mxu0
        %v1294 = vadd.f32 0.0, %v1293
        %1295 = vdwg.mxu0
        %1296 = vst [vmem:[%s382] sm:$0xff] %v1288
        %1297 = vst [vmem:[%s382 + $0x8] sm:$0xff] %v1290
        %1298 = vst [vmem:[%s382 + $0x10] sm:$0xff] %v1292
        %1299 = vst [vmem:[%s382 + $0x18] sm:$0xff] %v1294
        %s1300 = sand.u32 %s208, 1
        %s1301 = scalar_lea.sflag [#allocation4], %s1300
        %s1302 = sand.u32 %s208, 1
        %s1303 = smul.addr %s1302, 32
        %s1304 = scalar_lea.vmem [#allocation11], %s1303
        // Predicated region
        $region73: #{tpu_custom_call.1} parent=51 // pred_check
          %p1305 = pneg %p218
        $region74: #{tpu_custom_call.1} parent=51 // pred_check_branch
          %1307 = sbr.rel (%p1305) target = $region76
        $region75: #{tpu_custom_call.1} parent=51 // pred_region
          %s1308 = smul.u32 2, %s27
          %s1310 = ssub.s32 512, 512
          %1311 = vsyncadd %s1301, %s1310
          %s1312 = smul.addr %s1308, 2
          %s1313 = smul.addr %s1312, 128
          %s1314 = scalar_lea.hbm %s8, %s1313
          %s1315 = sshll.u32 %s1304, 4
          %s1316 = int_to_ptr.vmem [resolvable:$true] %s1315
          %1321 = dma.vmem_to_hbm [thread:$0]  %s1316, 512, %s1314, %s1301, 256, 256, 16
        $region76: #{tpu_custom_call.1} parent=51 // pred_fallthru
          _
      $region52: #{tpu_custom_call.1} parent=5 // pred_fallthru
        _
      %p1322 = scmp.le.s32.totalorder 2, %s22
      // Predicated region
      $region77: #{tpu_custom_call.1} parent=5 // pred_check
        %p1323 = pneg %p1322
      $region78: #{tpu_custom_call.1} parent=5 // pred_check_branch
        %1325 = sbr.rel (%p1323) target = $region80
      $region79: #{tpu_custom_call.1} parent=5 // pred_region
        %s1326 = ssub.s32 %s22, 2
        // Predicated region
        $region81: #{tpu_custom_call.1} parent=79 // pred_check
          %p1327 = pneg %p224
        $region82: #{tpu_custom_call.1} parent=79 // pred_check_branch
          %1329 = sbr.rel (%p1327) target = $region84
        $region83: #{tpu_custom_call.1} parent=79 // pred_region
          %s1330 = sand.u32 %s209, 1
          %s1331 = scalar_lea.sflag [#allocation4], %s1330
          %s1332 = sand.u32 %s209, 1
          %s1333 = smul.addr %s1332, 32
          %s1334 = scalar_lea.vmem [#allocation11], %s1333
          %1335 = dma.done %s1331, 512
        $region84: #{tpu_custom_call.1} parent=79 // pred_fallthru
          _
      $region80: #{tpu_custom_call.1} parent=5 // pred_fallthru
        _
    $region6: #{tpu_custom_call.1} parent=1 // loop_footer
      %s26 = sadd.s32 1, %s22
    $region7: #{tpu_custom_call.1} parent=1 // loop_footer_branch
      %21 = sbr.rel target = $region3
    $region8: #{tpu_custom_call.1} parent=1 // loop_exit
      _
    %1336 = vsyncpa [#allocation3], 1
    %s1337 = scalar_lea.sflag [#allocation3], 1
    %1338 = vsyncpa %s1337, 1
    %1339 = vsyncpa [#allocation6], 1
    %1340 = vsyncpa [#allocation9], 1
    %1341 = vsyncpa [#allocation4], 1
    %s1342 = scalar_lea.sflag [#allocation4], 1
    %1343 = vsyncpa %s1342, 1

</llo_original>
